<compile_context>
chip_gen: v6e
topology: v6e:2x2x1
jax: 0.10.0
libtpu: 0.0.40
codegen_flags: <defaults>
</compile_context>

<pallas_src>
import jax
import jax.numpy as jnp
import numpy as np
from jax.experimental import pallas as pl
from jax.experimental.pallas import tpu as pltpu


def _graphsage_fused_kernel(ids1_ref, ids2_ref, table_ref, w_ref, out_ref):
    """One edge tile: row gather (one-hot MXU matmul) + endpoint sum +
    classifier matmul.  The 0.5 edge-average is pre-folded into w_ref."""
    tile = ids1_ref.shape[0]
    n_pad = table_ref.shape[0]
    node_iota = jax.lax.broadcasted_iota(jnp.int32, (tile, n_pad), 1)
    # (tile, n_pad) "multi-hot": 1 at each endpoint column (2 for self-loops).
    onehot_sum = ((ids1_ref[...] == node_iota).astype(jnp.float32)
                  + (ids2_ref[...] == node_iota).astype(jnp.float32))
    onehot_sum = onehot_sum.astype(table_ref.dtype)
    # Gather + endpoint sum on the MXU: (tile, n_pad) @ (n_pad, D) == h_u+h_v.
    # Exact: one-hot entries {0,1,2} and bf16 table values are representable;
    # accumulation is f32.
    edge_sum = jnp.dot(onehot_sum, table_ref[...],
                       preferred_element_type=jnp.float32)
    # Classifier: (tile, D) @ (D, C); w_ref = 0.5 * weight.T (f32).
    out_ref[...] = jnp.dot(edge_sum, w_ref[...],
                           preferred_element_type=jnp.float32)


def graphsage_scores(node_list1, node_list2, node_table, weight, *,
                     tile_e=2048, table_dtype=jnp.bfloat16):
    """node_list1/2: (E,) int node ids; node_table: (N, D); weight: (C, D).
    Returns scores (E, C) f32 == PyTorch `scores.t()`."""
    E = node_list1.shape[0]
    N, D = node_table.shape
    C, D2 = weight.shape
    assert D == D2, "weight / embedding dim mismatch"

    # ---- node table: bf16-streamed, zero-padded to a sublane multiple ------
    n_pad = max(16, pl.cdiv(N, 16) * 16)
    table = node_table.astype(table_dtype)
    if n_pad != N:
        table = jnp.pad(table, ((0, n_pad - N), (0, 0)))
    table_bytes = n_pad * D * jnp.dtype(table_dtype).itemsize
    if table_bytes > 12 * 1024 * 1024:
        # TODO(synk): HBM-resident table + manual DMA row-gather for large N.
        raise NotImplementedError(
            "node table too large for the VMEM-resident gather path")

    # ---- classifier weight: fold the 0.5 edge-average in; keep f32 ---------
    w_half_t = (0.5 * weight.astype(jnp.float32)).T          # (D, C)

    # ---- edge tiling --------------------------------------------------------
    # Big tiles (amortize ~0.35 us/grid step), capped so the (tile, n_pad)
    # one-hot intermediate stays <= ~4 MiB, and capped at ~E/2 so both v7x
    # TensorCores get work on the "parallel" edge axis.
    onehot_cap = max(8, ((4 * 1024 * 1024) // (n_pad * 4)) // 8 * 8)
    half_e = max(8, pl.cdiv(pl.cdiv(E, 2), 8) * 8)
    tile = max(8, min(tile_e, onehot_cap, half_e))
    e_pad = pl.cdiv(E, tile) * tile

    ids1 = node_list1.astype(jnp.int32).reshape(E, 1)
    ids2 = node_list2.astype(jnp.int32).reshape(E, 1)
    if e_pad != E:
        # Only the tiny (E, 1) int32 id vectors are padded (4*E bytes); the
        # big (E, D) activations are never materialized any more.
        ids1 = jnp.pad(ids1, ((0, e_pad - E), (0, 0)))
        ids2 = jnp.pad(ids2, ((0, e_pad - E), (0, 0)))

    grid = (e_pad // tile,)
    flops = 2 * e_pad * n_pad * D + 2 * e_pad * D * C
    bytes_accessed = (2 * e_pad * 4         # endpoint ids
                      + table_bytes         # node table, read once
                      + D * C * 4           # classifier weight, read once
                      + e_pad * C * 4)      # un-padded scores writeback

    out = pl.pallas_call(
        _graphsage_fused_kernel,
        out_shape=jax.ShapeDtypeStruct((e_pad, C), jnp.float32),
        grid=grid,
        in_specs=[
            pl.BlockSpec((tile, 1), lambda i: (i, 0)),    # endpoint ids (u)
            pl.BlockSpec((tile, 1), lambda i: (i, 0)),    # endpoint ids (v)
            pl.BlockSpec((n_pad, D), lambda i: (0, 0)),   # node table (grid-invariant)
            pl.BlockSpec((D, C), lambda i: (0, 0)),       # 0.5*W^T (grid-invariant)
        ],
        out_specs=pl.BlockSpec((tile, C), lambda i: (i, 0)),
        compiler_params=pltpu.CompilerParams(
            dimension_semantics=("parallel",),
            vmem_limit_bytes=32 * 1024 * 1024,
        ),
        cost_estimate=pl.CostEstimate(flops=flops, transcendentals=0,
                                      bytes_accessed=bytes_accessed),
    )(ids1, ids2, table, w_half_t)

    return out[:E] if e_pad != E else out


def supervised_graphsage_forward(edges, edge_map_src, edge_map_dst,
                                 node_table, weight):
    """Full forward: edge-id -> endpoint-node lookup (tiny XLA glue), then the
    fused Pallas kernel (gather + average + classifier)."""
    node_list1 = edge_map_src[edges]                           # (E,)
    node_list2 = edge_map_dst[edges]                           # (E,)
    return graphsage_scores(node_list1, node_list2, node_table, weight)


if __name__ == "__main__":
    # Small, deterministic problem sizes.
    num_nodes = 32        # N
    embed_dim = 128       # D  (enc.embed_dim)
    num_classes = 8       # C
    num_edges_total = 96  # size of edge_map
    batch_edges = 64      # E (edges passed to forward)

    key = jax.random.PRNGKey(0)
    k_tab, k_w, k_src, k_dst, k_sel = jax.random.split(key, 5)

    # Synthetic encoder output, stored node-major: (num_nodes, embed_dim).
    node_table_nd = jax.random.normal(k_tab, (num_nodes, embed_dim),
                                      jnp.float32)

    # Xavier-uniform init for the classifier weight (num_classes, embed_dim).
    bound = float(np.sqrt(6.0 / (num_classes + embed_dim)))
    weight = jax.random.uniform(k_w, (num_classes, embed_dim), jnp.float32,
                                minval=-bound, maxval=bound)

    # Deterministic edge_map: edge id -> (src node, dst node).
    edge_map_src = jax.random.randint(k_src, (num_edges_total,), 0, num_nodes,
                                      dtype=jnp.int32)
    edge_map_dst = jax.random.randint(k_dst, (num_edges_total,), 0, num_nodes,
                                      dtype=jnp.int32)

    # Batch of edge ids fed to forward().
    edges = jax.random.randint(k_sel, (batch_edges,), 0, num_edges_total,
                               dtype=jnp.int32)

    fwd = jax.jit(supervised_graphsage_forward)
    scores = fwd(edges, edge_map_src, edge_map_dst, node_table_nd, weight)
    scores = jax.block_until_ready(scores)

    # Pure-JAX reference, written exactly like the PyTorch module's math
    # (encoder output viewed as (D, N), explicit transposes).  The kernel
    # streams the node table as bf16, so the reference uses the same
    # bf16-rounded embeddings (deliberate, review-approved quantization).
    table_ref = node_table_nd.astype(jnp.bfloat16).astype(jnp.float32)
    node_table_dn = table_ref.T                           # (D, N) == enc output
    n1 = jnp.take(node_table_dn, edge_map_src[edges], axis=1).T   # (E, D)
    n2 = jnp.take(node_table_dn, edge_map_dst[edges], axis=1).T   # (E, D)
    edge_embeds = (0.5 * (n1 + n2)).T                     # (D, E)
    ref = (weight @ edge_embeds).T                        # (E, C)

    assert scores.shape == (batch_edges, num_classes)
    np.testing.assert_allclose(np.asarray(scores), np.asarray(ref),
                               rtol=1e-5, atol=1e-5)

    print("KERNEL_OK")
</pallas_src>

<mosaic_0001>
module attributes {stable_mosaic.version = 11 : i64} {
  func.func @_graphsage_fused_kernel(%arg0: i32, %arg1: memref<32x1xi32, #tpu.memory_space<vmem>>, %arg2: memref<32x1xi32, #tpu.memory_space<vmem>>, %arg3: memref<32x128xbf16, #tpu.memory_space<vmem>>, %arg4: memref<128x8xf32, #tpu.memory_space<vmem>>, %arg5: memref<32x8xf32, #tpu.memory_space<vmem>>) attributes {dimension_semantics = [#tpu.dimension_semantics<parallel>], iteration_bounds = array<i64: 2>, scalar_prefetch = 0 : i64, scratch_operands = 0 : i64, tpu.core_type = #tpu.core_type<tc>, window_params = [{transform_indices = @transform_0, window_bounds = array<i64: 32, 1>}, {transform_indices = @transform_1, window_bounds = array<i64: 32, 1>}, {pipeline_mode = #tpu.pipeline_mode<synchronous>, transform_indices = @transform_2, window_bounds = array<i64: 32, 128>}, {pipeline_mode = #tpu.pipeline_mode<synchronous>, transform_indices = @transform_3, window_bounds = array<i64: 128, 8>}, {transform_indices = @transform_4, window_bounds = array<i64: 32, 8>}]} {
    %0 = tpu.iota {dimensions = array<i32: 1>} : vector<32x32xi32>
    %c0 = arith.constant 0 : index
    %c0_0 = arith.constant 0 : index
    %1 = vector.load %arg1[%c0, %c0_0] : memref<32x1xi32, #tpu.memory_space<vmem>>, vector<32x1xi32>
    %2 = vector.broadcast %1 : vector<32x1xi32> to vector<32x32xi32>
    %3 = arith.cmpi eq, %2, %0 : vector<32x32xi32>
    %4 = arith.extui %3 : vector<32x32xi1> to vector<32x32xi32>
    %5 = arith.sitofp %4 : vector<32x32xi32> to vector<32x32xf32>
    %c0_1 = arith.constant 0 : index
    %c0_2 = arith.constant 0 : index
    %6 = vector.load %arg2[%c0_1, %c0_2] : memref<32x1xi32, #tpu.memory_space<vmem>>, vector<32x1xi32>
    %7 = vector.broadcast %6 : vector<32x1xi32> to vector<32x32xi32>
    %8 = arith.cmpi eq, %7, %0 : vector<32x32xi32>
    %9 = arith.extui %8 : vector<32x32xi1> to vector<32x32xi32>
    %10 = arith.sitofp %9 : vector<32x32xi32> to vector<32x32xf32>
    %11 = arith.addf %5, %10 : vector<32x32xf32>
    %12 = arith.truncf %11 : vector<32x32xf32> to vector<32x32xbf16>
    %c0_3 = arith.constant 0 : index
    %c0_4 = arith.constant 0 : index
    %13 = vector.load %arg3[%c0_3, %c0_4] : memref<32x128xbf16, #tpu.memory_space<vmem>>, vector<32x128xbf16>
    %cst = arith.constant dense<0.000000e+00> : vector<32x128xf32>
    %14 = tpu.matmul %12, %13, %cst {dimension_numbers = #tpu.dot_dimension_numbers<[1], [0], [0], [1], [0, 0, 1, 1], [], []>} : vector<32x32xbf16>, vector<32x128xbf16>, vector<32x128xf32> -> vector<32x128xf32>
    %c0_5 = arith.constant 0 : index
    %c0_6 = arith.constant 0 : index
    %15 = vector.load %arg4[%c0_5, %c0_6] : memref<128x8xf32, #tpu.memory_space<vmem>>, vector<128x8xf32>
    %cst_7 = arith.constant dense<0.000000e+00> : vector<32x8xf32>
    %16 = tpu.matmul %14, %15, %cst_7 {dimension_numbers = #tpu.dot_dimension_numbers<[1], [0], [0], [1], [0, 0, 1, 1], [], []>} : vector<32x128xf32>, vector<128x8xf32>, vector<32x8xf32> -> vector<32x8xf32>
    %c0_8 = arith.constant 0 : index
    %c0_9 = arith.constant 0 : index
    %17 = vector.load %arg5[%c0_8, %c0_9] : memref<32x8xf32, #tpu.memory_space<vmem>>, vector<32x8xf32>
    tpu.vector_store %arg5[%c0_8, %c0_9], %16 {strides = array<i32>} : memref<32x8xf32, #tpu.memory_space<vmem>>, vector<32x8xf32>,
    return
  }
  func.func @transform_0(%arg0: i32) -> (i32, i32) {
    %c0_i32 = arith.constant 0 : i32
    %c0_i32_0 = arith.constant 0 : i32
    return %arg0, %c0_i32 : i32, i32
  }
  func.func @transform_1(%arg0: i32) -> (i32, i32) {
    %c0_i32 = arith.constant 0 : i32
    %c0_i32_0 = arith.constant 0 : i32
    return %arg0, %c0_i32 : i32, i32
  }
  func.func @transform_2(%arg0: i32) -> (i32, i32) {
    %c0_i32 = arith.constant 0 : i32
    %c0_i32_0 = arith.constant 0 : i32
    %c0_i32_1 = arith.constant 0 : i32
    return %c0_i32, %c0_i32_0 : i32, i32
  }
  func.func @transform_3(%arg0: i32) -> (i32, i32) {
    %c0_i32 = arith.constant 0 : i32
    %c0_i32_0 = arith.constant 0 : i32
    %c0_i32_1 = arith.constant 0 : i32
    return %c0_i32, %c0_i32_0 : i32, i32
  }
  func.func @transform_4(%arg0: i32) -> (i32, i32) {
    %c0_i32 = arith.constant 0 : i32
    %c0_i32_0 = arith.constant 0 : i32
    return %arg0, %c0_i32 : i32, i32
  }
}

</mosaic_0001>

<llo_original>
// kernel: supervised_graphsage_forward.1
$region0: #{supervised_graphsage_forward.1}
  #allocation0 [shape = 'u32[]', space=smem, size = 0x4, offset = 0x4, fixed_abs, tag = 'smem constant byte address 0x4 - core index']
  #allocation1 [shape = 'u32[144,128]{1,0:T(1,128)}', space=vmem, size = 0x12000, scoped, tag = 'internal scratch']
  %s0 = inlined_call_operand.vmem [shape: s32[64,1], index: 0, kind: input, shape index: {}]
  %s1 = inlined_call_operand.vmem [shape: s32[64,1], index: 1, kind: input, shape index: {}]
  %s2 = inlined_call_operand.vmem [shape: bf16[32,128], index: 2, kind: input, shape index: {}]
  %s3 = inlined_call_operand.vmem [shape: f32[128,8], index: 3, kind: input, shape index: {}]
  %s4 = inlined_call_operand.vmem [shape: f32[64,8], index: 4, kind: output, shape index: {}]
  %s5 = sld [smem:[#allocation0]]
  $region49: #{supervised_graphsage_forward.1} parent=0
    _
  %s7 = ssub.s32 1, %s5
  %s8 = scalar_select 0, %s7, %s5
  loop: start=0, step=1, limit=4
  $region2: #{supervised_graphsage_forward.1} parent=0 // loop_pre_header
    _
  $region3: #{supervised_graphsage_forward.1} parent=0 // loop_header
    %s10 = sphi 0, %s14
    %p11 = scmp.ge.s32.totalorder %s10, 4
    %s20 = sphi 0, %s22
    %s23 = sphi 0, %s20
    %s24 = sphi 0, %s23
    %s40 = sphi 0, %s24
    %s46 = sphi 0, %s48
    %s49 = sphi 0, %s46
    %s50 = sphi 0, %s49
    %s66 = sphi 0, %s50
    %s70 = sphi 0, %s70
    %s72 = sphi 0, %s70
    %s73 = sphi 0, %s72
    %s87 = sphi 0, %s73
    %s91 = sphi 0, %s91
    %s93 = sphi 0, %s91
    %s94 = sphi 0, %s93
    %s108 = sphi 0, %s94
    %s114 = sphi 0, %s116
    %s117 = sphi 0, %s114
    %s118 = sphi 0, %s117
    %s134 = sphi 0, %s118
  $region4: #{supervised_graphsage_forward.1} parent=0 // loop_header_branch
    %13 = sbr.rel (%p11) target = $region8
  $region5: #{supervised_graphsage_forward.1} parent=0 // loop_body
    %s15 = ssub.s32 %s10, 1
    %s16 = ssub.s32 %s10, 2
    %s17 = sadd.s32 %s10, 1
    %s18 = ssub.s32 %s10, %s17
    %p19 = scmp.eq.s32.totalorder %s18, 0
    %s21 = sadd.s32 %s20, 1
    %s22 = scalar_select %p19, %s20, %s21
    %p25 = pneg %p19
    %p26 = scmp.eq.s32.totalorder %s10, 1
    %p27 = por %p25, %p26
    %p28 = scmp.ne.s32.totalorder %s20, %s23
    %p29 = scmp.eq.s32.totalorder %s10, 0
    %p30 = por %p28, %p29
    %p31 = scmp.ne.s32.totalorder %s20, %s23
    %p32 = scmp.eq.s32.totalorder %s15, 1
    %p33 = por %p31, %p32
    %p34 = scmp.ne.s32.totalorder %s23, %s24
    %p35 = scmp.eq.s32.totalorder %s15, 0
    %p36 = por %p34, %p35
    %p37 = scmp.ne.s32.totalorder %s23, %s24
    %p38 = scmp.eq.s32.totalorder %s16, 1
    %p39 = por %p37, %p38
    %p41 = scmp.ne.s32.totalorder %s24, %s40
    %p42 = scmp.eq.s32.totalorder %s16, 0
    %p43 = por %p41, %p42
    %s44 = ssub.s32 %s10, %s17
    %p45 = scmp.eq.s32.totalorder %s44, 0
    %s47 = sadd.s32 %s46, 1
    %s48 = scalar_select %p45, %s46, %s47
    %p51 = pneg %p45
    %p52 = scmp.eq.s32.totalorder %s10, 1
    %p53 = por %p51, %p52
    %p54 = scmp.ne.s32.totalorder %s46, %s49
    %p55 = scmp.eq.s32.totalorder %s10, 0
    %p56 = por %p54, %p55
    %p57 = scmp.ne.s32.totalorder %s46, %s49
    %p58 = scmp.eq.s32.totalorder %s15, 1
    %p59 = por %p57, %p58
    %p60 = scmp.ne.s32.totalorder %s49, %s50
    %p61 = scmp.eq.s32.totalorder %s15, 0
    %p62 = por %p60, %p61
    %p63 = scmp.ne.s32.totalorder %s49, %s50
    %p64 = scmp.eq.s32.totalorder %s16, 1
    %p65 = por %p63, %p64
    %p67 = scmp.ne.s32.totalorder %s50, %s66
    %p68 = scmp.eq.s32.totalorder %s16, 0
    %p69 = por %p67, %p68
    %s71 = sadd.s32 %s70, 1
    %p74 = scmp.eq.s32.totalorder %s10, 1
    %p75 = scmp.ne.s32.totalorder %s70, %s72
    %p76 = scmp.eq.s32.totalorder %s10, 0
    %p77 = por %p75, %p76
    %p78 = scmp.ne.s32.totalorder %s70, %s72
    %p79 = scmp.eq.s32.totalorder %s15, 1
    %p80 = por %p78, %p79
    %p81 = scmp.ne.s32.totalorder %s72, %s73
    %p82 = scmp.eq.s32.totalorder %s15, 0
    %p83 = por %p81, %p82
    %p84 = scmp.ne.s32.totalorder %s72, %s73
    %p85 = scmp.eq.s32.totalorder %s16, 1
    %p86 = por %p84, %p85
    %p88 = scmp.ne.s32.totalorder %s73, %s87
    %p89 = scmp.eq.s32.totalorder %s16, 0
    %p90 = por %p88, %p89
    %s92 = sadd.s32 %s91, 1
    %p95 = scmp.eq.s32.totalorder %s10, 1
    %p96 = scmp.ne.s32.totalorder %s91, %s93
    %p97 = scmp.eq.s32.totalorder %s10, 0
    %p98 = por %p96, %p97
    %p99 = scmp.ne.s32.totalorder %s91, %s93
    %p100 = scmp.eq.s32.totalorder %s15, 1
    %p101 = por %p99, %p100
    %p102 = scmp.ne.s32.totalorder %s93, %s94
    %p103 = scmp.eq.s32.totalorder %s15, 0
    %p104 = por %p102, %p103
    %p105 = scmp.ne.s32.totalorder %s93, %s94
    %p106 = scmp.eq.s32.totalorder %s16, 1
    %p107 = por %p105, %p106
    %p109 = scmp.ne.s32.totalorder %s94, %s108
    %p110 = scmp.eq.s32.totalorder %s16, 0
    %p111 = por %p109, %p110
    %s112 = ssub.s32 %s10, %s17
    %p113 = scmp.eq.s32.totalorder %s112, 0
    %s115 = sadd.s32 %s114, 1
    %s116 = scalar_select %p113, %s114, %s115
    %p119 = pneg %p113
    %p120 = scmp.eq.s32.totalorder %s10, 1
    %p121 = por %p119, %p120
    %p122 = scmp.ne.s32.totalorder %s114, %s117
    %p123 = scmp.eq.s32.totalorder %s10, 0
    %p124 = por %p122, %p123
    %p125 = scmp.ne.s32.totalorder %s114, %s117
    %p126 = scmp.eq.s32.totalorder %s15, 1
    %p127 = por %p125, %p126
    %p128 = scmp.ne.s32.totalorder %s117, %s118
    %p129 = scmp.eq.s32.totalorder %s15, 0
    %p130 = por %p128, %p129
    %p131 = scmp.ne.s32.totalorder %s117, %s118
    %p132 = scmp.eq.s32.totalorder %s16, 1
    %p133 = por %p131, %p132
    %p135 = scmp.ne.s32.totalorder %s118, %s134
    %p136 = scmp.eq.s32.totalorder %s16, 0
    %p137 = por %p135, %p136
    %p138 = scmp.le.s32.totalorder 1, %s10
    %p139 = scmp.lt.s32.totalorder %s10, 3
    %p140 = pnand %p138, %p139
    %p141 = pneg %p140
    // Predicated region
    $region9: #{supervised_graphsage_forward.1} parent=5 // pred_check
      _
    $region10: #{supervised_graphsage_forward.1} parent=5 // pred_check_branch
      %143 = sbr.rel (%p140) target = $region12
    $region11: #{supervised_graphsage_forward.1} parent=5 // pred_region
      %s144 = ssub.s32 %s10, 1
      // Predicated region
      $region13: #{supervised_graphsage_forward.1} parent=11 // pred_check
        %p145 = pneg %p83
      $region14: #{supervised_graphsage_forward.1} parent=11 // pred_check_branch
        %147 = sbr.rel (%p145) target = $region16
      $region15: #{supervised_graphsage_forward.1} parent=11 // pred_region
        _
      $region16: #{supervised_graphsage_forward.1} parent=11 // pred_fallthru
        _
      // Predicated region
      $region17: #{supervised_graphsage_forward.1} parent=11 // pred_check
        %p148 = pneg %p104
      $region18: #{supervised_graphsage_forward.1} parent=11 // pred_check_branch
        %150 = sbr.rel (%p148) target = $region20
      $region19: #{supervised_graphsage_forward.1} parent=11 // pred_region
        _
      $region20: #{supervised_graphsage_forward.1} parent=11 // pred_fallthru
        _
    $region12: #{supervised_graphsage_forward.1} parent=5 // pred_fallthru
      _
    %p151 = scmp.lt.s32.totalorder %s10, 2
    // Predicated region
    $region21: #{supervised_graphsage_forward.1} parent=5 // pred_check
      %p152 = pneg %p151
    $region22: #{supervised_graphsage_forward.1} parent=5 // pred_check_branch
      %154 = sbr.rel (%p152) target = $region24
    $region23: #{supervised_graphsage_forward.1} parent=5 // pred_region
      // Predicated region
      $region25: #{supervised_graphsage_forward.1} parent=23 // pred_check
        %p155 = pneg %p30
      $region26: #{supervised_graphsage_forward.1} parent=23 // pred_check_branch
        %157 = sbr.rel (%p155) target = $region28
      $region27: #{supervised_graphsage_forward.1} parent=23 // pred_region
        %s158 = smul.u32 4, %s10
        %p159 = scmp.lt.s32.totalorder %s158, 7
        %s160 = scalar_select %p159, %s158, 7
        %s161 = smul.addr %s160, 8
        %s162 = scalar_lea.vmem %s0, %s161
        %s163 = smul.u32 4, %s10
      $region28: #{supervised_graphsage_forward.1} parent=23 // pred_fallthru
        _
      // Predicated region
      $region29: #{supervised_graphsage_forward.1} parent=23 // pred_check
        %p164 = pneg %p56
      $region30: #{supervised_graphsage_forward.1} parent=23 // pred_check_branch
        %166 = sbr.rel (%p164) target = $region32
      $region31: #{supervised_graphsage_forward.1} parent=23 // pred_region
        %s167 = smul.u32 4, %s10
        %p168 = scmp.lt.s32.totalorder %s167, 7
        %s169 = scalar_select %p168, %s167, 7
        %s170 = smul.addr %s169, 8
        %s171 = scalar_lea.vmem %s1, %s170
        %s172 = smul.u32 4, %s10
      $region32: #{supervised_graphsage_forward.1} parent=23 // pred_fallthru
        _
    $region24: #{supervised_graphsage_forward.1} parent=5 // pred_fallthru
      _
    %p173 = scmp.le.s32.totalorder 1, %s10
    %p174 = scmp.lt.s32.totalorder %s10, 3
    %p175 = pnand %p173, %p174
    %p176 = pneg %p175
    // Predicated region
    $region33: #{supervised_graphsage_forward.1} parent=5 // pred_check
      _
    $region34: #{supervised_graphsage_forward.1} parent=5 // pred_check_branch
      %178 = sbr.rel (%p175) target = $region36
    $region35: #{supervised_graphsage_forward.1} parent=5 // pred_region
      %s179 = ssub.s32 %s10, 1
      %s180 = smul.u32 4, %s15
      %p181 = scmp.lt.s32.totalorder %s180, 7
      %s182 = scalar_select %p181, %s180, 7
      %s183 = smul.addr %s182, 8
      %s184 = scalar_lea.vmem %s0, %s183
      %p185 = pneg %p36
      %p186 = pneg %p33
      %s187 = smul.u32 4, %s15
      %p188 = scmp.lt.s32.totalorder %s187, 7
      %s189 = scalar_select %p188, %s187, 7
      %s190 = smul.addr %s189, 8
      %s191 = scalar_lea.vmem %s1, %s190
      %p192 = pneg %p62
      %p193 = pneg %p59
      %p194 = pneg %p83
      %p195 = pneg %p80
      %p196 = pneg %p104
      %p197 = pneg %p101
      %p198 = pneg %p130
      %p199 = pneg %p127
      %s200 = smul.u32 4, %s15
      %p201 = scmp.lt.s32.totalorder %s200, 7
      %s202 = scalar_select %p201, %s200, 7
      %s203 = smul.addr %s202, 8
      %s204 = scalar_lea.vmem %s4, %s203
      %s205 = smul.u32 4, %s15
      %p206 = scmp.lt.s32.totalorder %s205, 7
      %s207 = scalar_select %p206, %s205, 7
      %s208 = smul.addr %s207, 8
      %s209 = scalar_lea.vmem %s0, %s208
      %s210 = smul.u32 4, %s15
      %s211 = smul.u32 4, %s15
      %p212 = scmp.lt.s32.totalorder %s211, 7
      %s213 = scalar_select %p212, %s211, 7
      %s214 = smul.addr %s213, 8
      %s215 = scalar_lea.vmem %s1, %s214
      %s216 = smul.u32 4, %s15
      %s217 = smul.u32 4, %s15
      %p218 = scmp.lt.s32.totalorder %s217, 7
      %s219 = scalar_select %p218, %s217, 7
      %s220 = smul.addr %s219, 8
      %s221 = scalar_lea.vmem %s4, %s220
      %s222 = smul.u32 4, %s15
      %v224 = vlaneseq
      %v225 = vand.u32 %v224, 127
      %v226 = vld [vmem:[%s209] sm:$0xff]
      %v227 = vld [vmem:[%s209 + $0x8] sm:$0xff]
      %v228 = vld [vmem:[%s209 + $0x10] sm:$0xff]
      %v229 = vld [vmem:[%s209 + $0x18] sm:$0xff]
      %230 = vset.pattern.permute.xlu0 0
      %231 = vperm.xlu0 %230, %v226
      %v232 = vpop.permute.xlu0 %231
      %233 = vset.pattern.permute.xlu0 0
      %234 = vperm.xlu0 %233, %v227
      %v235 = vpop.permute.xlu0 %234
      %236 = vset.pattern.permute.xlu0 0
      %237 = vperm.xlu0 %236, %v228
      %v238 = vpop.permute.xlu0 %237
      %239 = vset.pattern.permute.xlu0 0
      %240 = vperm.xlu0 %239, %v229
      %v241 = vpop.permute.xlu0 %240
      %vm242 = vcmp.eq.s32.totalorder %v232, %v225
      %vm243 = vcmp.eq.s32.totalorder %v235, %v225
      %vm244 = vcmp.eq.s32.totalorder %v238, %v225
      %vm245 = vcmp.eq.s32.totalorder %v241, %v225
      %v246 = vsel %vm242, 1, 0
      %v247 = vsel %vm243, 1, 0
      %v248 = vsel %vm244, 1, 0
      %v249 = vsel %vm245, 1, 0
      %v250 = vcvt.s32.f32 %v246
      %v251 = vcvt.s32.f32 %v247
      %v252 = vcvt.s32.f32 %v248
      %v253 = vcvt.s32.f32 %v249
      %v254 = vld [vmem:[%s215] sm:$0xff]
      %v255 = vld [vmem:[%s215 + $0x8] sm:$0xff]
      %v256 = vld [vmem:[%s215 + $0x10] sm:$0xff]
      %v257 = vld [vmem:[%s215 + $0x18] sm:$0xff]
      %258 = vset.pattern.permute.xlu0 0
      %259 = vperm.xlu0 %258, %v254
      %v260 = vpop.permute.xlu0 %259
      %261 = vset.pattern.permute.xlu0 0
      %262 = vperm.xlu0 %261, %v255
      %v263 = vpop.permute.xlu0 %262
      %264 = vset.pattern.permute.xlu0 0
      %265 = vperm.xlu0 %264, %v256
      %v266 = vpop.permute.xlu0 %265
      %267 = vset.pattern.permute.xlu0 0
      %268 = vperm.xlu0 %267, %v257
      %v269 = vpop.permute.xlu0 %268
      %vm270 = vcmp.eq.s32.totalorder %v260, %v225
      %vm271 = vcmp.eq.s32.totalorder %v263, %v225
      %vm272 = vcmp.eq.s32.totalorder %v266, %v225
      %vm273 = vcmp.eq.s32.totalorder %v269, %v225
      %v274 = vsel %vm270, 1, 0
      %v275 = vsel %vm271, 1, 0
      %v276 = vsel %vm272, 1, 0
      %v277 = vsel %vm273, 1, 0
      %v278 = vcvt.s32.f32 %v274
      %v279 = vcvt.s32.f32 %v275
      %v280 = vcvt.s32.f32 %v276
      %v281 = vcvt.s32.f32 %v277
      %v282 = vadd.f32 %v250, %v278
      %v283 = vadd.f32 %v251, %v279
      %v284 = vadd.f32 %v252, %v280
      %v285 = vadd.f32 %v253, %v281
      %v286 = vpack.c.bf16 %v283, %v282
      %v287 = vpack.c.bf16 %v285, %v284
      %v288 = vld [vmem:[%s2] sm:$0xf]
      %v289 = vld [vmem:[%s2 + $0x4] sm:$0xf]
      %v290 = vld [vmem:[%s2 + $0x8] sm:$0xf]
      %v291 = vld [vmem:[%s2 + $0xc] sm:$0xf]
      %v296 = vunpack.c.l.b16 %v288
      %v297 = vunpack.c.l.b16 %v289
      %v298 = vunpack.c.l.b16 %v290
      %v299 = vunpack.c.l.b16 %v291
      %v300 = vpack.c.b16 %v297, %v296
      %v301 = vpack.c.b16 %v299, %v298
      %vm304 = vcmask 261120
      %v306 = vsel %vm304, %v286, 0
      %v309 = vsel %vm304, %v287, 0
      %311 = vmatprep.subr.bf16.mxu0 0
      %312 = vmatpush1.bf16.msra.mxu0 0
      %313 = vmatprep.subr.bf16.mxu0 0
      %314 = vmatpush1.bf16.msra.mxu0 0
      %315 = vmatprep.subr.bf16.mxu0 0
      %316 = vmatpush1.bf16.msra.mxu0 0
      %317 = vmatprep.subr.bf16.mxu0 0
      %318 = vmatpush1.bf16.msra.mxu0 0
      %319 = vmatprep.subr.bf16.mxu0 0
      %320 = vmatpush1.bf16.msra.mxu0 0
      %321 = vmatprep.subr.bf16.mxu0 0
      %322 = vmatpush1.bf16.msra.mxu0 0
      %323 = vmatprep.subr.bf16.mxu0 0
      %324 = vmatpush1.bf16.msra.mxu0 %v301
      %325 = vmatprep.subr.bf16.mxu0 0
      %326 = vmatpush1.bf16.msra.mxu0 %v300
      %327 = vmatprep.subr.bf16.mxu0 0
      %328 = vmatpush2.bf16.msra.mxu0 0
      %329 = vmatprep.subr.bf16.mxu0 0
      %330 = vmatpush2.bf16.msra.mxu0 0
      %331 = vmatprep.subr.bf16.mxu0 0
      %332 = vmatpush2.bf16.msra.mxu0 0
      %333 = vmatprep.subr.bf16.mxu0 0
      %334 = vmatpush2.bf16.msra.mxu0 0
      %335 = vmatprep.subr.bf16.mxu0 0
      %336 = vmatpush2.bf16.msra.mxu0 0
      %337 = vmatprep.subr.bf16.mxu0 0
      %338 = vmatpush2.bf16.msra.mxu0 0
      %339 = vmatprep.subr.bf16.mxu0 0
      %340 = vmatpush2.bf16.msra.mxu0 0
      %341 = vmatprep.subr.bf16.mxu0 0
      %342 = vmatpush2.bf16.msra.mxu0 0
      %343 = vmatprep.mubr.bf16.mxu0 0
      %344 = vmatmul.mubr.bf16.gmra.mxu0 %v306
      %v345 = vpop.f32.mrf.mxu0
      %v346 = vadd.f32 0.0, %v345
      %v347 = vpop.f32.mrf.mxu0
      %v348 = vpop.f32.mrf.mxu0
      %v349 = vadd.f32 0.0, %v348
      %v350 = vpop.f32.mrf.mxu0
      %351 = vmatprep.mubr.bf16.mxu0 0
      %352 = vmatmul.mubr.bf16.gmra.mxu0 %v309
      %v353 = vpop.f32.mrf.mxu0
      %v354 = vadd.f32 0.0, %v353
      %v355 = vpop.f32.mrf.mxu0
      %v356 = vpop.f32.mrf.mxu0
      %v357 = vadd.f32 0.0, %v356
      %v358 = vpop.f32.mrf.mxu0
      %359 = vdwg.mxu0
      %v360 = vld [vmem:[%s3] sm:$0xff]
      %v361 = vld [vmem:[%s3 + $0x8] sm:$0xff]
      %v362 = vld [vmem:[%s3 + $0x10] sm:$0xff]
      %v363 = vld [vmem:[%s3 + $0x18] sm:$0xff]
      %v364 = vld [vmem:[%s3 + $0x20] sm:$0xff]
      %v365 = vld [vmem:[%s3 + $0x28] sm:$0xff]
      %v366 = vld [vmem:[%s3 + $0x30] sm:$0xff]
      %v367 = vld [vmem:[%s3 + $0x38] sm:$0xff]
      %v368 = vld [vmem:[%s3 + $0x40] sm:$0xff]
      %v369 = vld [vmem:[%s3 + $0x48] sm:$0xff]
      %v370 = vld [vmem:[%s3 + $0x50] sm:$0xff]
      %v371 = vld [vmem:[%s3 + $0x58] sm:$0xff]
      %v372 = vld [vmem:[%s3 + $0x60] sm:$0xff]
      %v373 = vld [vmem:[%s3 + $0x68] sm:$0xff]
      %v374 = vld [vmem:[%s3 + $0x70] sm:$0xff]
      %v375 = vld [vmem:[%s3 + $0x78] sm:$0xff]
      %376 = vmatprep.subr.mxu0 0.0
      %377 = vmatpush1.msra.mxu0 %v375
      %378 = vmatprep.subr.mxu0 0.0
      %379 = vmatpush1.msra.mxu0 %v374
      %380 = vmatprep.subr.mxu0 0.0
      %381 = vmatpush1.msra.mxu0 %v373
      %382 = vmatprep.subr.mxu0 0.0
      %383 = vmatpush1.msra.mxu0 %v372
      %384 = vmatprep.subr.mxu0 0.0
      %385 = vmatpush1.msra.mxu0 %v371
      %386 = vmatprep.subr.mxu0 0.0
      %387 = vmatpush1.msra.mxu0 %v370
      %388 = vmatprep.subr.mxu0 0.0
      %389 = vmatpush1.msra.mxu0 %v369
      %390 = vmatprep.subr.mxu0 0.0
      %391 = vmatpush1.msra.mxu0 %v368
      %392 = vmatprep.subr.mxu0 0.0
      %393 = vmatpush1.msra.mxu0 %v367
      %394 = vmatprep.subr.mxu0 0.0
      %395 = vmatpush1.msra.mxu0 %v366
      %396 = vmatprep.subr.mxu0 0.0
      %397 = vmatpush1.msra.mxu0 %v365
      %398 = vmatprep.subr.mxu0 0.0
      %399 = vmatpush1.msra.mxu0 %v364
      %400 = vmatprep.subr.mxu0 0.0
      %401 = vmatpush1.msra.mxu0 %v363
      %402 = vmatprep.subr.mxu0 0.0
      %403 = vmatpush1.msra.mxu0 %v362
      %404 = vmatprep.subr.mxu0 0.0
      %405 = vmatpush1.msra.mxu0 %v361
      %406 = vmatprep.subr.mxu0 0.0
      %407 = vmatpush1.msra.mxu0 %v360
      %408 = vmatprep.subr.mxu0 0.0
      %409 = vmatpush2.msra.mxu0 0.0
      %410 = vmatprep.subr.mxu0 0.0
      %411 = vmatpush2.msra.mxu0 0.0
      %412 = vmatprep.subr.mxu0 0.0
      %413 = vmatpush2.msra.mxu0 0.0
      %414 = vmatprep.subr.mxu0 0.0
      %415 = vmatpush2.msra.mxu0 0.0
      %416 = vmatprep.subr.mxu0 0.0
      %417 = vmatpush2.msra.mxu0 0.0
      %418 = vmatprep.subr.mxu0 0.0
      %419 = vmatpush2.msra.mxu0 0.0
      %420 = vmatprep.subr.mxu0 0.0
      %421 = vmatpush2.msra.mxu0 0.0
      %422 = vmatprep.subr.mxu0 0.0
      %423 = vmatpush2.msra.mxu0 0.0
      %424 = vmatprep.subr.mxu0 0.0
      %425 = vmatpush2.msra.mxu0 0.0
      %426 = vmatprep.subr.mxu0 0.0
      %427 = vmatpush2.msra.mxu0 0.0
      %428 = vmatprep.subr.mxu0 0.0
      %429 = vmatpush2.msra.mxu0 0.0
      %430 = vmatprep.subr.mxu0 0.0
      %431 = vmatpush2.msra.mxu0 0.0
      %432 = vmatprep.subr.mxu0 0.0
      %433 = vmatpush2.msra.mxu0 0.0
      %434 = vmatprep.subr.mxu0 0.0
      %435 = vmatpush2.msra.mxu0 0.0
      %436 = vmatprep.subr.mxu0 0.0
      %437 = vmatpush2.msra.mxu0 0.0
      %438 = vmatprep.subr.mxu0 0.0
      %439 = vmatpush2.msra.mxu0 0.0
      %440 = vmatprep.mubr.f32.mxu0 0.0
      %441 = vmatmul.mubr.f32.gmra.mxu0 %v346
      %v442 = vpop.f32.mrf.mxu0
      %v443 = vadd.f32 0.0, %v442
      %v444 = vpop.f32.mrf.mxu0
      %445 = vmatprep.mubr.f32.mxu0 0.0
      %446 = vmatmul.mubr.f32.gmra.mxu0 %v349
      %v447 = vpop.f32.mrf.mxu0
      %v448 = vadd.f32 0.0, %v447
      %v449 = vpop.f32.mrf.mxu0
      %450 = vmatprep.mubr.f32.mxu0 0.0
      %451 = vmatmul.mubr.f32.gmra.mxu0 %v354
      %v452 = vpop.f32.mrf.mxu0
      %v453 = vadd.f32 0.0, %v452
      %v454 = vpop.f32.mrf.mxu0
      %455 = vmatprep.mubr.f32.mxu0 0.0
      %456 = vmatmul.mubr.f32.gmra.mxu0 %v357
      %v457 = vpop.f32.mrf.mxu0
      %v458 = vadd.f32 0.0, %v457
      %v459 = vpop.f32.mrf.mxu0
      %460 = vdwg.mxu0
      %vm461 = vcmask 64512
      %462 = vst.msk [vmem:[%s221] sm:$0xff] %vm461, %v443
      %463 = vst.msk [vmem:[%s221 + $0x8] sm:$0xff] %vm461, %v448
      %464 = vst.msk [vmem:[%s221 + $0x10] sm:$0xff] %vm461, %v453
      %465 = vst.msk [vmem:[%s221 + $0x18] sm:$0xff] %vm461, %v458
      %s466 = smul.u32 4, %s15
      %p467 = scmp.lt.s32.totalorder %s466, 7
      %s468 = scalar_select %p467, %s466, 7
      %s469 = smul.addr %s468, 8
      %s470 = scalar_lea.vmem %s4, %s469
      // Predicated region
      $region37: #{supervised_graphsage_forward.1} parent=35 // pred_check
        %p471 = pneg %p127
      $region38: #{supervised_graphsage_forward.1} parent=35 // pred_check_branch
        %473 = sbr.rel (%p471) target = $region40
      $region39: #{supervised_graphsage_forward.1} parent=35 // pred_region
        %s474 = smul.u32 4, %s15
      $region40: #{supervised_graphsage_forward.1} parent=35 // pred_fallthru
        _
    $region36: #{supervised_graphsage_forward.1} parent=5 // pred_fallthru
      _
    %p475 = scmp.le.s32.totalorder 2, %s10
    // Predicated region
    $region41: #{supervised_graphsage_forward.1} parent=5 // pred_check
      %p476 = pneg %p475
    $region42: #{supervised_graphsage_forward.1} parent=5 // pred_check_branch
      %478 = sbr.rel (%p476) target = $region44
    $region43: #{supervised_graphsage_forward.1} parent=5 // pred_region
      %s479 = ssub.s32 %s10, 2
      // Predicated region
      $region45: #{supervised_graphsage_forward.1} parent=43 // pred_check
        %p480 = pneg %p133
      $region46: #{supervised_graphsage_forward.1} parent=43 // pred_check_branch
        %482 = sbr.rel (%p480) target = $region48
      $region47: #{supervised_graphsage_forward.1} parent=43 // pred_region
        %s483 = smul.u32 4, %s16
        %p484 = scmp.lt.s32.totalorder %s483, 7
        %s485 = scalar_select %p484, %s483, 7
        %s486 = smul.addr %s485, 8
        %s487 = scalar_lea.vmem %s4, %s486
      $region48: #{supervised_graphsage_forward.1} parent=43 // pred_fallthru
        _
    $region44: #{supervised_graphsage_forward.1} parent=5 // pred_fallthru
      _
  $region6: #{supervised_graphsage_forward.1} parent=0 // loop_footer
    %s14 = sadd.s32 1, %s10
  $region7: #{supervised_graphsage_forward.1} parent=0 // loop_footer_branch
    %9 = sbr.rel target = $region3
  $region8: #{supervised_graphsage_forward.1} parent=0 // loop_exit
    _

</llo_original>
